<compile_context>
chip_gen: v7x
topology: tpu7x:2x2x1
jax: 0.10.0
libtpu: 0.0.40
codegen_flags: <defaults>
</compile_context>

<pallas_src>
import numpy as np

import jax
import jax.numpy as jnp
from jax.experimental import pallas as pl
from jax.experimental.pallas import tpu as pltpu


# ---------------------------------------------------------------------------
# small helpers
# ---------------------------------------------------------------------------

def _fold_rows_to_8(v):
    """(R, C) -> (8, C) by summing 8-row slabs with element-wise (VPU) adds."""
    r = v.shape[0]
    out = v[0:8, :]
    for s in range(1, r // 8):
        out = out + v[8 * s:8 * (s + 1), :]
    return out


def _chip_vmem_budget():
    """Per-core VMEM budget with headroom (v5e/v6e: 128 MiB, v7x: 64 MiB)."""
    try:
        cap = int(pltpu.get_tpu_info().vmem_capacity_bytes)
    except Exception:
        cap = 64 * 2**20            # assume the smallest generation if unknown
    return max(24 * 2**20, cap - 16 * 2**20)


def _vmem_limit(estimate_bytes, budget):
    return int(min(budget, max(24 * 2**20,
                               estimate_bytes + estimate_bytes // 4 + (2 << 20))))


# ---------------------------------------------------------------------------
# kernels
# ---------------------------------------------------------------------------

def _encode_kernel(x_ref, w_enc_ref, b_enc_ref, acts_ref):
    """acts = relu(x @ W_enc + b_enc_eff) for one (batch, dict) tile.

    b_dec is folded into b_enc_eff in the wrapper; x/W_enc arrive in bf16 and
    the matmul accumulates in f32 on the MXU.
    """
    pre = jnp.dot(x_ref[...], w_enc_ref[...], preferred_element_type=jnp.float32)
    acts_ref[...] = jnp.maximum(pre + b_enc_ref[...], 0.0).astype(acts_ref.dtype)


def _decode_kernel(acts_ref, w_dec_ref, b_dec_ref, sae_out_ref, colsum_ref, colcnt_ref):
    """recon = acts_topk @ W_dec + b_dec, plus per-(batch, dict)-tile statistics.

    grid = (batch_tiles, dict_tiles).  The dict axis is the reduction axis and
    must be innermost + "arbitrary": sae_out's block index is constant across
    it, so it stays resident in VMEM and is written back once at the end.
    """
    d = pl.program_id(1)
    partial = jnp.dot(acts_ref[...], w_dec_ref[...], preferred_element_type=jnp.float32)

    @pl.when(d == 0)
    def _():
        sae_out_ref[...] = partial + b_dec_ref[...]

    @pl.when(d != 0)
    def _():
        sae_out_ref[...] += partial

    # Column-sum / nonzero-count partials, folded to 8 sublanes on the VPU.
    # acts_topk >= 0, so the column sums double as the l1 partials.
    a = acts_ref[...].astype(jnp.float32)
    colsum_ref[...] = _fold_rows_to_8(a)[None]
    colcnt_ref[...] = _fold_rows_to_8((a > 0.0).astype(jnp.float32))[None]


# ---------------------------------------------------------------------------
# batch top-k (+ dense scatter) -- XLA glue, two-stage with exact fallback
# ---------------------------------------------------------------------------

def _batch_topk_scatter(acts, k_total, candidates_per_row):
    """Dense (B, D) array keeping the global top-k values of `acts`, rest 0."""
    B, D = acts.shape
    flat_n = B * D

    def exact(_):
        tv, ti = jax.lax.top_k(acts.reshape(-1), k_total)
        return jnp.zeros((flat_n,), acts.dtype).at[ti].set(tv).reshape(B, D)

    R = int(min(D, max(candidates_per_row, 1)))
    if R >= D or B * R <= 2 * k_total:       # two-stage would not pay off
        return exact(None)

    # Stage 1: per-row top-R candidates.  Stage 2: global top-k over B*R.
    row_vals, row_idx = jax.lax.top_k(acts, R)                    # (B, R)
    g_vals, g_pos = jax.lax.top_k(row_vals.reshape(-1), k_total)  # (k_total,)
    rows = g_pos // R

    # If some row contributed all R of its candidates, values beyond R in that
    # row might also belong to the global top-k -> fall back to the exact path.
    saturated = jnp.any(jnp.zeros((B,), jnp.int32).at[rows].add(1) >= R)

    def candidate(_):
        cols = row_idx[rows, g_pos % R]
        return jnp.zeros((flat_n,), acts.dtype).at[rows * D + cols].set(g_vals).reshape(B, D)

    return jax.lax.cond(saturated, exact, candidate, None)


# ---------------------------------------------------------------------------
# auxiliary loss (data-dependent top-k over dead features) -- XLA glue
# ---------------------------------------------------------------------------

def _auxiliary_loss(x_f32, sae_out_f32, acts, w_dec_mm, dead_mask, top_k_aux, aux_penalty):
    B, D = acts.shape
    k = min(int(top_k_aux), D)
    dead_count = jnp.sum(dead_mask.astype(jnp.int32))
    fill = -3.0e38                              # << any relu activation, bf16-safe

    def compute(_):
        masked = jnp.where(dead_mask[None, :], acts, jnp.asarray(fill, acts.dtype))
        vals, idx = jax.lax.top_k(masked, k)                 # per-row top-k over dead cols
        keep = vals > jnp.asarray(fill * 0.5, jnp.float32)   # drop padded (non-dead) picks
        vals = jnp.where(keep, vals, jnp.zeros((), acts.dtype))
        acts_aux = jnp.zeros_like(acts).at[jnp.arange(B)[:, None], idx].set(vals)
        recon_aux = jnp.dot(acts_aux, w_dec_mm, preferred_element_type=jnp.float32)
        residual = x_f32 - sae_out_f32
        return aux_penalty * jnp.mean((recon_aux - residual) ** 2)

    return jax.lax.cond(dead_count > 0, compute,
                        lambda _: jnp.asarray(0.0, jnp.float32), None)


# ---------------------------------------------------------------------------
# forward pass wrapper
# ---------------------------------------------------------------------------

def batch_topk_sae_forward(x, params, num_batches_not_active, cfg,
                           batch_tile=512, dict_tile=1024,
                           matmul_dtype=jnp.bfloat16, debug_outputs=False):
    """BatchTopKSAE.forward.  Returns (output dict, updated num_batches_not_active)."""
    # ---- preprocess_input (glue; mirrors torch incl. unbiased std) ----
    if cfg.get('input_unit_norm', False):
        x_mean = jnp.mean(x, axis=-1, keepdims=True)
        x = x - x_mean
        x_std = jnp.std(x, axis=-1, keepdims=True, ddof=1)    # torch .std() is unbiased
        x = x / (x_std + 1e-05)
    else:
        x_mean, x_std = None, None

    x_f32 = x.astype(jnp.float32)
    B, A = x_f32.shape
    D = params['W_enc'].shape[1]

    TB = min(batch_tile, B)
    TD = min(dict_tile, D)
    itemsize_mm = jnp.dtype(matmul_dtype).itemsize
    budget = _chip_vmem_budget()

    def _enc_bytes(tb, td):
        return 2 * (tb * A * itemsize_mm + A * td * itemsize_mm + td * 4
                    + tb * td * itemsize_mm)

    def _dec_bytes(tb, td):
        return 2 * (tb * td * itemsize_mm + td * A * itemsize_mm + A * 4
                    + tb * A * 4 + 2 * 8 * td * 4)

    # Auto-shrink tiles until the footprint fits the chip budget (v7x: 64 MiB/TC).
    while (max(_enc_bytes(TB, TD), _dec_bytes(TB, TD)) > budget
           and TD > 128 and TD % 256 == 0 and D % (TD // 2) == 0):
        TD //= 2
    while (max(_enc_bytes(TB, TD), _dec_bytes(TB, TD)) > budget
           and TB > 16 and TB % 32 == 0 and B % (TB // 2) == 0):
        TB //= 2

    assert B % TB == 0 and TB % 16 == 0, "batch tile must divide B and be a multiple of 16 (bf16 packing)"
    assert D % TD == 0 and (TD % 128 == 0 or TD == D), "dict tile must divide D / be lane-aligned"
    assert A % 128 == 0, "act_size must be a multiple of 128 (TPU lane width)"
    nb, nd = B // TB, D // TD

    w_enc = params['W_enc'].astype(matmul_dtype)              # bf16 weights: half DMA + VMEM
    w_dec = params['W_dec'].astype(matmul_dtype)
    b_dec = params['b_dec'].reshape(1, A).astype(jnp.float32)
    # Fold b_dec into the encoder bias: (x - b_dec) @ W_enc + b_enc == x @ W_enc + b_enc_eff.
    b_enc_eff = (params['b_enc'].astype(jnp.float32).reshape(1, D)
                 - jnp.dot(b_dec, params['W_enc'].astype(jnp.float32),
                           preferred_element_type=jnp.float32,
                           precision=jax.lax.Precision.HIGHEST))
    x_mm = x_f32.astype(matmul_dtype)

    # ---------------- encoder kernel ----------------
    acts = pl.pallas_call(
        _encode_kernel,
        out_shape=jax.ShapeDtypeStruct((B, D), matmul_dtype),
        grid=(nb, nd),
        in_specs=[
            pl.BlockSpec((TB, A), lambda i, d: (i, 0)),       # x (bf16)
            pl.BlockSpec((A, TD), lambda i, d: (0, d)),       # W_enc (dict-tiled, bf16)
            pl.BlockSpec((1, TD), lambda i, d: (0, d)),       # b_enc_eff (f32)
        ],
        out_specs=pl.BlockSpec((TB, TD), lambda i, d: (i, d)),
        compiler_params=pltpu.CompilerParams(
            dimension_semantics=("parallel", "parallel"),
            vmem_limit_bytes=_vmem_limit(_enc_bytes(TB, TD), budget)),
    )(x_mm, w_enc, b_enc_eff)

    # ---------------- batch top-k (glue; global data-dependent selection) ----------------
    k_total = int(cfg['top_k']) * B
    acts_topk = _batch_topk_scatter(acts, k_total,
                                    candidates_per_row=4 * int(cfg['top_k']))

    # ---------------- decoder + statistics kernel ----------------
    out_shapes = (
        jax.ShapeDtypeStruct((B, A), jnp.float32),            # x_reconstruct
        jax.ShapeDtypeStruct((nb, 8, D), jnp.float32),         # column-sum partials
        jax.ShapeDtypeStruct((nb, 8, D), jnp.float32),         # column nonzero-count partials
    )
    sae_out, colsum_p, colcnt_p = pl.pallas_call(
        _decode_kernel,
        out_shape=out_shapes,
        grid=(nb, nd),
        in_specs=[
            pl.BlockSpec((TB, TD), lambda i, d: (i, d)),      # acts_topk (bf16)
            pl.BlockSpec((TD, A), lambda i, d: (d, 0)),       # W_dec (dict-tiled, bf16)
            pl.BlockSpec((1, A), lambda i, d: (0, 0)),        # b_dec (f32)
        ],
        out_specs=(
            pl.BlockSpec((TB, A), lambda i, d: (i, 0)),       # resident across dict axis
            pl.BlockSpec((1, 8, TD), lambda i, d: (i, 0, d)),
            pl.BlockSpec((1, 8, TD), lambda i, d: (i, 0, d)),
        ),
        compiler_params=pltpu.CompilerParams(
            # dict axis (1) must stay innermost + "arbitrary": sae_out accumulator.
            dimension_semantics=("parallel", "arbitrary"),
            vmem_limit_bytes=_vmem_limit(_dec_bytes(TB, TD), budget)),
    )(acts_topk, w_dec, b_dec)

    # ---------------- scalar math / state update (wrapper glue) ----------------
    col_sums = jnp.sum(colsum_p, axis=(0, 1))                 # (D,)
    l1_sum = jnp.sum(col_sums)                                # acts_topk >= 0 -> l1 == sum
    l0_sum = jnp.sum(colcnt_p)

    l2_loss = jnp.mean((sae_out - x_f32) ** 2)                # cheap B x A pass (x dropped from kernel)
    l1_norm = l1_sum / B
    l1_loss = cfg['l1_coeff'] * l1_norm
    l0_norm = l0_sum / B

    # update_inactive_features(acts_topk)
    nba = num_batches_not_active.astype(jnp.float32)
    new_nba = jnp.where(col_sums > 0.0, 0.0, nba + 1.0)
    num_dead = jnp.sum((new_nba > cfg['n_batches_to_dead']).astype(jnp.int32))

    # NOTE: aux-loss dead mask uses >= while num_dead_features uses >, mirroring the torch source.
    dead_mask = new_nba >= cfg['n_batches_to_dead']
    aux_loss = _auxiliary_loss(x_f32, sae_out, acts, w_dec, dead_mask,
                               int(cfg['top_k_aux']), float(cfg['aux_penalty']))

    loss = l2_loss + l1_loss + aux_loss

    # ---- postprocess_output (glue) ----
    sae_out_post = sae_out
    if cfg.get('input_unit_norm', False):
        sae_out_post = sae_out_post * x_std + x_mean

    output = {
        'sae_out': sae_out_post,
        'feature_acts': acts_topk,
        'num_dead_features': num_dead,
        'loss': loss,
        'l1_loss': l1_loss,
        'l2_loss': l2_loss,
        'l0_norm': l0_norm,
        'l1_norm': l1_norm,
        'aux_loss': aux_loss,
    }
    if debug_outputs:
        output['_pre_topk_acts'] = acts            # bf16, for validation only
        output['_x_reconstruct'] = sae_out         # pre-postprocess recon, for validation only
    return output, new_nba


# ---------------------------------------------------------------------------
# parameter init (mirrors BaseAutoencoder.__init__ shapes / scheme)
# ---------------------------------------------------------------------------

def init_params(key, act_size, dict_size, dtype=jnp.float32):
    k_enc, _ = jax.random.split(key)
    bound = (6.0 / dict_size) ** 0.5
    W_enc = jax.random.uniform(k_enc, (act_size, dict_size), dtype,
                               minval=-bound, maxval=bound)
    W_dec = W_enc.T
    W_dec = W_dec / jnp.linalg.norm(W_dec, axis=-1, keepdims=True)
    return {
        'W_enc': W_enc,
        'W_dec': W_dec,
        'b_enc': jnp.zeros((dict_size,), dtype),
        'b_dec': jnp.zeros((act_size,), dtype),
    }


# ---------------------------------------------------------------------------
# eager NumPy reference (torch translation, f64 accumulation, mirrors bf16 casts)
# ---------------------------------------------------------------------------

def _reference_forward_numpy(x, params, nba, cfg, kernel_acts, kernel_acts_topk, kernel_sae_out):
    """Top-k selection is taken from the kernel (tie resolution is ambiguous in
    bf16); everything else is recomputed in f64 from the same bf16-rounded
    operands the kernels see."""
    B, A = x.shape

    def as_bf16_f64(v):
        return np.asarray(jnp.asarray(v, jnp.float32).astype(jnp.bfloat16)
                          .astype(jnp.float32), np.float64)

    x64 = np.asarray(x, np.float64)
    w_enc_bf = as_bf16_f64(params['W_enc'])
    w_dec_bf = as_bf16_f64(params['W_dec'])
    b_dec64 = np.asarray(params['b_dec'], np.float64)
    b_enc_eff = (np.asarray(params['b_enc'], np.float64)
                 - b_dec64 @ np.asarray(params['W_enc'], np.float64))

    acts = np.maximum(as_bf16_f64(x) @ w_enc_bf + b_enc_eff, 0.0)

    acts_topk = np.asarray(kernel_acts_topk, np.float64)
    recon = acts_topk @ w_dec_bf + b_dec64

    col = acts_topk.sum(0)
    nba = np.asarray(nba, np.float64).copy()
    nba = nba + (col == 0.0)
    nba[col > 0.0] = 0.0

    l2_loss = np.mean((recon - x64) ** 2)
    l1_norm = np.abs(acts_topk).sum(-1).mean()
    l1_loss = cfg['l1_coeff'] * l1_norm
    l0_norm = (acts_topk > 0).sum(-1).mean()

    dead = nba >= cfg['n_batches_to_dead']
    acts_used = np.asarray(kernel_acts, np.float64)
    if dead.sum() > 0:
        residual = x64 - np.asarray(kernel_sae_out, np.float64)
        acts_dead = acts_used[:, dead]
        kk = int(min(cfg['top_k_aux'], dead.sum()))
        rows = np.arange(B)[:, None]
        top_idx = np.argsort(-acts_dead, axis=-1, kind='stable')[:, :kk]
        acts_aux = np.zeros_like(acts_dead)
        acts_aux[rows, top_idx] = acts_dead[rows, top_idx]
        recon_aux = acts_aux @ w_dec_bf[dead]
        aux_loss = cfg['aux_penalty'] * np.mean((recon_aux - residual) ** 2)
    else:
        aux_loss = 0.0

    return {
        'acts': acts, 'sae_out': recon,
        'loss': l2_loss + l1_loss + aux_loss, 'l1_loss': l1_loss, 'l2_loss': l2_loss,
        'l0_norm': l0_norm, 'l1_norm': l1_norm, 'aux_loss': aux_loss,
        'num_dead_features': int((nba > cfg['n_batches_to_dead']).sum()),
        'new_nba': nba,
    }


# ---------------------------------------------------------------------------
# demo / self-check
# ---------------------------------------------------------------------------

if __name__ == "__main__":
    cfg = {
        'seed': 0,
        'act_size': 128,
        'dict_size': 256,
        'top_k': 4,
        'top_k_aux': 16,
        'aux_penalty': 1.0 / 32,
        'l1_coeff': 1e-3,
        'n_batches_to_dead': 3,
        'input_unit_norm': False,    # torch default path
    }
    batch = 32

    key = jax.random.PRNGKey(0)
    kx, kp, kb1, kb2 = jax.random.split(key, 4)
    x = jax.random.normal(kx, (batch, cfg['act_size']), jnp.float32)
    params = init_params(kp, cfg['act_size'], cfg['dict_size'])
    # non-zero biases so the folded-bias encoder path is actually exercised
    params['b_dec'] = 0.05 * jax.random.normal(kb1, (cfg['act_size'],), jnp.float32)
    params['b_enc'] = 0.05 * jax.random.normal(kb2, (cfg['dict_size'],), jnp.float32)
    # start some features near "dead" so the auxiliary-loss path is exercised
    nba0 = jnp.where(jnp.arange(cfg['dict_size']) % 2 == 0, 5.0, 0.0).astype(jnp.float32)

    # Small tiles here only to exercise the multi-tile index maps / accumulator
    # paths at toy sizes; production defaults are batch_tile=512, dict_tile=1024.
    output, new_nba = batch_topk_sae_forward(
        x, params, nba0, cfg, batch_tile=16, dict_tile=128,
        matmul_dtype=jnp.bfloat16, debug_outputs=True)
    jax.block_until_ready(output['loss'])

    # ---- correctness checks against an eager NumPy reference ----
    acts_k = np.asarray(output['_pre_topk_acts'].astype(jnp.float32))
    fa = np.asarray(output['feature_acts'].astype(jnp.float32))
    sae_out_k = np.asarray(output['_x_reconstruct'])

    # top-k structural properties (tie-agnostic: bf16 values can tie)
    k_total = cfg['top_k'] * batch
    nz = fa > 0.0
    n_pos = int((acts_k > 0.0).sum())
    assert int(nz.sum()) == min(k_total, n_pos), "top-k count mismatch"
    assert np.array_equal(fa[nz], acts_k[nz]), "selected values must equal acts"
    thr = float(fa[nz].min())
    assert float(acts_k[~nz].max()) <= thr, "top-k threshold property violated"

    ref = _reference_forward_numpy(np.asarray(x), params, np.asarray(nba0), cfg,
                                   kernel_acts=acts_k, kernel_acts_topk=fa,
                                   kernel_sae_out=sae_out_k)

    def close(a, b, tol):
        return np.allclose(np.asarray(a, np.float64), np.asarray(b, np.float64),
                           atol=tol, rtol=tol)

    assert close(acts_k, ref['acts'], 2e-2), "encoder mismatch"
    assert close(sae_out_k, ref['sae_out'], 2e-3), "reconstruction mismatch"
    assert close(output['l2_loss'], ref['l2_loss'], 1e-3), "l2 mismatch"
    assert close(output['l1_loss'], ref['l1_loss'], 1e-3), "l1 mismatch"
    assert close(output['l1_norm'], ref['l1_norm'], 1e-3), "l1_norm mismatch"
    assert close(output['l0_norm'], ref['l0_norm'], 1e-6), "l0_norm mismatch"
    assert close(output['aux_loss'], ref['aux_loss'], 1e-3), "aux loss mismatch"
    assert close(output['loss'], ref['loss'], 1e-3), "loss mismatch"
    assert int(output['num_dead_features']) == ref['num_dead_features'], "num_dead mismatch"
    assert np.array_equal(np.asarray(new_nba),
                          np.asarray(ref['new_nba'], np.float32)), "nba state mismatch"

    print("KERNEL_OK")
</pallas_src>

<mosaic_0001>
module attributes {stable_mosaic.version = 11 : i64} {
  func.func @_encode_kernel(%arg0: i32, %arg1: i32, %arg2: memref<16x128xbf16, #tpu.memory_space<vmem>>, %arg3: memref<128x128xbf16, #tpu.memory_space<vmem>>, %arg4: memref<1x128xf32, #tpu.memory_space<vmem>>, %arg5: memref<16x128xbf16, #tpu.memory_space<vmem>>) attributes {dimension_semantics = [#tpu.dimension_semantics<parallel>, #tpu.dimension_semantics<parallel>], iteration_bounds = array<i64: 2, 2>, scalar_prefetch = 0 : i64, scratch_operands = 0 : i64, tpu.core_type = #tpu.core_type<tc>, window_params = [{transform_indices = @transform_0, window_bounds = array<i64: 16, 128>}, {transform_indices = @transform_1, window_bounds = array<i64: 128, 128>}, {transform_indices = @transform_2, window_bounds = array<i64: 1, 128>}, {transform_indices = @transform_3, window_bounds = array<i64: 16, 128>}]} {
    %c0 = arith.constant 0 : index
    %c0_0 = arith.constant 0 : index
    %0 = vector.load %arg2[%c0, %c0_0] : memref<16x128xbf16, #tpu.memory_space<vmem>>, vector<16x128xbf16>
    %c0_1 = arith.constant 0 : index
    %c0_2 = arith.constant 0 : index
    %1 = vector.load %arg3[%c0_1, %c0_2] : memref<128x128xbf16, #tpu.memory_space<vmem>>, vector<128x128xbf16>
    %cst = arith.constant dense<0.000000e+00> : vector<16x128xf32>
    %2 = tpu.matmul %0, %1, %cst {dimension_numbers = #tpu.dot_dimension_numbers<[1], [0], [0], [1], [0, 0, 1, 1], [], []>} : vector<16x128xbf16>, vector<128x128xbf16>, vector<16x128xf32> -> vector<16x128xf32>
    %c0_3 = arith.constant 0 : index
    %c0_4 = arith.constant 0 : index
    %3 = vector.load %arg4[%c0_3, %c0_4] : memref<1x128xf32, #tpu.memory_space<vmem>>, vector<1x128xf32>
    %4 = vector.broadcast %3 : vector<1x128xf32> to vector<16x128xf32>
    %5 = arith.addf %2, %4 : vector<16x128xf32>
    %cst_5 = arith.constant 0.000000e+00 : f32
    %6 = vector.broadcast %cst_5 : f32 to vector<16x128xf32>
    %7 = arith.maximumf %5, %6 : vector<16x128xf32>
    %8 = arith.truncf %7 : vector<16x128xf32> to vector<16x128xbf16>
    %c0_6 = arith.constant 0 : index
    %c0_7 = arith.constant 0 : index
    %9 = vector.load %arg5[%c0_6, %c0_7] : memref<16x128xbf16, #tpu.memory_space<vmem>>, vector<16x128xbf16>
    tpu.vector_store %arg5[%c0_6, %c0_7], %8 {strides = array<i32>} : memref<16x128xbf16, #tpu.memory_space<vmem>>, vector<16x128xbf16>,
    return
  }
  func.func @transform_0(%arg0: i32, %arg1: i32) -> (i32, i32) {
    %c0_i32 = arith.constant 0 : i32
    %c0_i32_0 = arith.constant 0 : i32
    return %arg0, %c0_i32 : i32, i32
  }
  func.func @transform_1(%arg0: i32, %arg1: i32) -> (i32, i32) {
    %c0_i32 = arith.constant 0 : i32
    %c0_i32_0 = arith.constant 0 : i32
    return %c0_i32, %arg1 : i32, i32
  }
  func.func @transform_2(%arg0: i32, %arg1: i32) -> (i32, i32) {
    %c0_i32 = arith.constant 0 : i32
    %c0_i32_0 = arith.constant 0 : i32
    return %c0_i32, %arg1 : i32, i32
  }
  func.func @transform_3(%arg0: i32, %arg1: i32) -> (i32, i32) {
    %c0_i32 = arith.constant 0 : i32
    return %arg0, %arg1 : i32, i32
  }
}

</mosaic_0001>

<llo_original>
// kernel: tpu_custom_call.1
$region0: #{tpu_custom_call.1}
  #allocation0 [shape = 'u32[]', space=smem, size = 0x4, offset = 0x4, fixed_abs, tag = 'smem constant byte address 0x4 - core index']
  #allocation1 [shape = 'u32[144,128]{1,0:T(1,128)}', space=vmem, size = 0x12000, scoped, tag = 'internal scratch']
  %s0 = inlined_call_operand.hbm [shape: bf16[32,128], index: 0, kind: input, shape index: {}]
  %s1 = inlined_call_operand.hbm [shape: bf16[128,256], index: 1, kind: input, shape index: {}]
  %s2 = inlined_call_operand.vmem [shape: f32[1,256], index: 2, kind: input, shape index: {}]
  %s3 = inlined_call_operand.hbm [shape: bf16[32,256], index: 3, kind: output, shape index: {}]
  %s4 = sld [smem:[#allocation0]]
  $region53: #{tpu_custom_call.1} parent=0
    _
  %s6 = ssub.s32 1, %s4
  %s7 = scalar_select 0, %s6, %s4
  $region1: #{tpu_custom_call.1} parent=0
    #allocation2 [shape = 'u8[8192]{0}', space=vmem, size = 0x2000, scoped, tag = 'input window, operand 0']
    #allocation3 [shape = 's32[2]{0}', space=sflag, size = 0x8, scoped, tag = 'scoped memory for tpu_custom_call.1']
    #allocation4 [shape = 's32[2]{0}', space=sflag, size = 0x8, scoped, tag = 'scoped memory for tpu_custom_call.1']
    #allocation5 [shape = 'u8[65536]{0}', space=vmem, size = 0x10000, scoped, tag = 'input window, operand 1']
    #allocation6 [shape = 's32[2]{0}', space=sflag, size = 0x8, scoped, tag = 'scoped memory for tpu_custom_call.1']
    #allocation7 [shape = 'u8[8192]{0}', space=vmem, size = 0x2000, scoped, tag = 'output window, operand 0']
    %8 = vsyncpa [#allocation3], 0
    %s9 = scalar_lea.sflag [#allocation3], 1
    %10 = vsyncpa %s9, 0
    %11 = vsyncpa [#allocation6], 0
    %s12 = scalar_lea.sflag [#allocation6], 1
    %13 = vsyncpa %s12, 0
    %14 = vsyncpa [#allocation4], 0
    %s15 = scalar_lea.sflag [#allocation4], 1
    %16 = vsyncpa %s15, 0
    loop: start=0, step=1, limit=6
    $region2: #{tpu_custom_call.1} parent=1 // loop_pre_header
      _
    $region3: #{tpu_custom_call.1} parent=1 // loop_header
      %s18 = sphi 0, %s22
      %p19 = scmp.ge.s32.totalorder %s18, 6
      %s25 = sphi 0, %s37
      %s26 = sphi 0, %s33
      %s27 = sphi 0, %s25
      %s28 = sphi 0, %s26
      %s29 = sphi 0, %s27
      %s30 = sphi 0, %s28
      %s40 = sphi 0, %s42
      %s43 = sphi 0, %s40
      %s44 = sphi 0, %s43
      %s60 = sphi 0, %s44
      %s66 = sphi 0, %s68
      %s69 = sphi 0, %s66
      %s70 = sphi 0, %s69
      %s86 = sphi 0, %s70
      %s92 = sphi 0, %s94
      %s95 = sphi 0, %s92
      %s96 = sphi 0, %s95
      %s112 = sphi 0, %s96
      %s120 = sphi 0, %s122
      %s123 = sphi 0, %s120
      %s124 = sphi 0, %s123
      %s140 = sphi 0, %s124
    $region4: #{tpu_custom_call.1} parent=1 // loop_header_branch
      %21 = sbr.rel (%p19) target = $region8
    $region5: #{tpu_custom_call.1} parent=1 // loop_body
      %s23 = ssub.s32 %s18, 1
      %s24 = ssub.s32 %s18, 2
      %s31 = sadd.s32 1, %s26
      %p32 = scmp.ge.s32.totalorder %s31, 2
      %s33 = scalar_select %p32, 0, %s31
      %s34 = sadd.s32 1, %s25
      %s35 = scalar_select %p32, %s34, %s25
      %p36 = scmp.ge.s32.totalorder %s35, 2
      %s37 = scalar_select %p36, 0, %s35
      %s38 = ssub.s32 %s25, %s37
      %p39 = scmp.eq.s32.totalorder %s38, 0
      %s41 = sadd.s32 %s40, 1
      %s42 = scalar_select %p39, %s40, %s41
      %p45 = pneg %p39
      %p46 = scmp.eq.s32.totalorder %s18, 3
      %p47 = por %p45, %p46
      %p48 = scmp.ne.s32.totalorder %s40, %s43
      %p49 = scmp.eq.s32.totalorder %s18, 0
      %p50 = por %p48, %p49
      %p51 = scmp.ne.s32.totalorder %s40, %s43
      %p52 = scmp.eq.s32.totalorder %s23, 3
      %p53 = por %p51, %p52
      %p54 = scmp.ne.s32.totalorder %s43, %s44
      %p55 = scmp.eq.s32.totalorder %s23, 0
      %p56 = por %p54, %p55
      %p57 = scmp.ne.s32.totalorder %s43, %s44
      %p58 = scmp.eq.s32.totalorder %s24, 3
      %p59 = por %p57, %p58
      %p61 = scmp.ne.s32.totalorder %s44, %s60
      %p62 = scmp.eq.s32.totalorder %s24, 0
      %p63 = por %p61, %p62
      %s64 = ssub.s32 %s26, %s33
      %p65 = scmp.eq.s32.totalorder %s64, 0
      %s67 = sadd.s32 %s66, 1
      %s68 = scalar_select %p65, %s66, %s67
      %p71 = pneg %p65
      %p72 = scmp.eq.s32.totalorder %s18, 3
      %p73 = por %p71, %p72
      %p74 = scmp.ne.s32.totalorder %s66, %s69
      %p75 = scmp.eq.s32.totalorder %s18, 0
      %p76 = por %p74, %p75
      %p77 = scmp.ne.s32.totalorder %s66, %s69
      %p78 = scmp.eq.s32.totalorder %s23, 3
      %p79 = por %p77, %p78
      %p80 = scmp.ne.s32.totalorder %s69, %s70
      %p81 = scmp.eq.s32.totalorder %s23, 0
      %p82 = por %p80, %p81
      %p83 = scmp.ne.s32.totalorder %s69, %s70
      %p84 = scmp.eq.s32.totalorder %s24, 3
      %p85 = por %p83, %p84
      %p87 = scmp.ne.s32.totalorder %s70, %s86
      %p88 = scmp.eq.s32.totalorder %s24, 0
      %p89 = por %p87, %p88
      %s90 = ssub.s32 %s26, %s33
      %p91 = scmp.eq.s32.totalorder %s90, 0
      %s93 = sadd.s32 %s92, 1
      %s94 = scalar_select %p91, %s92, %s93
      %p97 = pneg %p91
      %p98 = scmp.eq.s32.totalorder %s18, 3
      %p99 = por %p97, %p98
      %p100 = scmp.ne.s32.totalorder %s92, %s95
      %p101 = scmp.eq.s32.totalorder %s18, 0
      %p102 = por %p100, %p101
      %p103 = scmp.ne.s32.totalorder %s92, %s95
      %p104 = scmp.eq.s32.totalorder %s23, 3
      %p105 = por %p103, %p104
      %p106 = scmp.ne.s32.totalorder %s95, %s96
      %p107 = scmp.eq.s32.totalorder %s23, 0
      %p108 = por %p106, %p107
      %p109 = scmp.ne.s32.totalorder %s95, %s96
      %p110 = scmp.eq.s32.totalorder %s24, 3
      %p111 = por %p109, %p110
      %p113 = scmp.ne.s32.totalorder %s96, %s112
      %p114 = scmp.eq.s32.totalorder %s24, 0
      %p115 = por %p113, %p114
      %s116 = ssub.s32 %s25, %s37
      %s117 = ssub.s32 %s26, %s33
      %s118 = sor.u32 %s116, %s117
      %p119 = scmp.eq.s32.totalorder %s118, 0
      %s121 = sadd.s32 %s120, 1
      %s122 = scalar_select %p119, %s120, %s121
      %p125 = pneg %p119
      %p126 = scmp.eq.s32.totalorder %s18, 3
      %p127 = por %p125, %p126
      %p128 = scmp.ne.s32.totalorder %s120, %s123
      %p129 = scmp.eq.s32.totalorder %s18, 0
      %p130 = por %p128, %p129
      %p131 = scmp.ne.s32.totalorder %s120, %s123
      %p132 = scmp.eq.s32.totalorder %s23, 3
      %p133 = por %p131, %p132
      %p134 = scmp.ne.s32.totalorder %s123, %s124
      %p135 = scmp.eq.s32.totalorder %s23, 0
      %p136 = por %p134, %p135
      %p137 = scmp.ne.s32.totalorder %s123, %s124
      %p138 = scmp.eq.s32.totalorder %s24, 3
      %p139 = por %p137, %p138
      %p141 = scmp.ne.s32.totalorder %s124, %s140
      %p142 = scmp.eq.s32.totalorder %s24, 0
      %p143 = por %p141, %p142
      %p144 = scmp.le.s32.totalorder 1, %s18
      %p145 = scmp.lt.s32.totalorder %s18, 5
      %p146 = pnand %p144, %p145
      %p147 = pneg %p146
      // Predicated region
      $region9: #{tpu_custom_call.1} parent=5 // pred_check
        _
      $region10: #{tpu_custom_call.1} parent=5 // pred_check_branch
        %149 = sbr.rel (%p146) target = $region12
      $region11: #{tpu_custom_call.1} parent=5 // pred_region
        %s150 = ssub.s32 %s18, 1
      $region12: #{tpu_custom_call.1} parent=5 // pred_fallthru
        _
      %p151 = scmp.lt.s32.totalorder %s18, 4
      // Predicated region
      $region13: #{tpu_custom_call.1} parent=5 // pred_check
        %p152 = pneg %p151
      $region14: #{tpu_custom_call.1} parent=5 // pred_check_branch
        %154 = sbr.rel (%p152) target = $region16
      $region15: #{tpu_custom_call.1} parent=5 // pred_region
        // Predicated region
        $region17: #{tpu_custom_call.1} parent=15 // pred_check
          %p155 = pneg %p50
        $region18: #{tpu_custom_call.1} parent=15 // pred_check_branch
          %157 = sbr.rel (%p155) target = $region20
        $region19: #{tpu_custom_call.1} parent=15 // pred_region
          %s158 = sand.u32 %s40, 1
          %s159 = scalar_lea.sflag [#allocation3], %s158
          %s160 = sand.u32 %s40, 1
          %s161 = smul.addr %s160, 8
          %s162 = scalar_lea.vmem [#allocation2], %s161
          %s163 = smul.u32 2, %s25
          %s165 = ssub.s32 128, 128
          %166 = vsyncadd %s159, %s165
          %s167 = smul.addr %s163, 64
          %s168 = scalar_lea.hbm %s0, %s167
          %s169 = sshll.u32 %s162, 4
          %s170 = int_to_ptr.vmem [resolvable:$true] %s169
          %175 = dma.hbm_to_vmem [thread:$0]  %s168, 128, %s170, %s159, 64, 64, 4
        $region20: #{tpu_custom_call.1} parent=15 // pred_fallthru
          _
        // Predicated region
        $region21: #{tpu_custom_call.1} parent=15 // pred_check
          %p176 = pneg %p76
        $region22: #{tpu_custom_call.1} parent=15 // pred_check_branch
          %178 = sbr.rel (%p176) target = $region24
        $region23: #{tpu_custom_call.1} parent=15 // pred_region
          %s179 = sand.u32 %s66, 1
          %s180 = scalar_lea.sflag [#allocation6], %s179
          %s181 = sand.u32 %s66, 1
          %s182 = smul.addr %s181, 64
          %s183 = scalar_lea.vmem [#allocation5], %s182
          %s185 = ssub.s32 1024, 1024
          %186 = vsyncadd %s180, %s185
          %s187 = smul.addr %s26, 64
          %s188 = scalar_lea.hbm %s1, %s187
          %s189 = sshll.u32 %s183, 4
          %s190 = int_to_ptr.vmem [resolvable:$true] %s189
          %195 = dma.hbm_to_vmem [thread:$0]  %s188, 1024, %s190, %s180, 128, 64, 4
        $region24: #{tpu_custom_call.1} parent=15 // pred_fallthru
          _
        // Predicated region
        $region25: #{tpu_custom_call.1} parent=15 // pred_check
          %p196 = pneg %p102
        $region26: #{tpu_custom_call.1} parent=15 // pred_check_branch
          %198 = sbr.rel (%p196) target = $region28
        $region27: #{tpu_custom_call.1} parent=15 // pred_region
          %p199 = scmp.lt.s32.totalorder %s26, 1
          %s200 = scalar_select %p199, %s26, 1
          %s201 = scalar_lea.vmem %s2, %s200
        $region28: #{tpu_custom_call.1} parent=15 // pred_fallthru
          _
      $region16: #{tpu_custom_call.1} parent=5 // pred_fallthru
        _
      %p202 = scmp.le.s32.totalorder 1, %s18
      %p203 = scmp.lt.s32.totalorder %s18, 5
      %p204 = pnand %p202, %p203
      %p205 = pneg %p204
      // Predicated region
      $region29: #{tpu_custom_call.1} parent=5 // pred_check
        _
      $region30: #{tpu_custom_call.1} parent=5 // pred_check_branch
        %207 = sbr.rel (%p204) target = $region32
      $region31: #{tpu_custom_call.1} parent=5 // pred_region
        %s208 = ssub.s32 %s18, 1
        %s209 = sand.u32 %s43, 1
        %s210 = scalar_lea.sflag [#allocation3], %s209
        %s211 = sand.u32 %s43, 1
        %s212 = smul.addr %s211, 8
        %s213 = scalar_lea.vmem [#allocation2], %s212
        // Predicated region
        $region33: #{tpu_custom_call.1} parent=31 // pred_check
          %p214 = pneg %p56
        $region34: #{tpu_custom_call.1} parent=31 // pred_check_branch
          %216 = sbr.rel (%p214) target = $region36
        $region35: #{tpu_custom_call.1} parent=31 // pred_region
          %217 = dma.done %s210, 128
        $region36: #{tpu_custom_call.1} parent=31 // pred_fallthru
          _
        %s218 = sand.u32 %s69, 1
        %s219 = scalar_lea.sflag [#allocation6], %s218
        %s220 = sand.u32 %s69, 1
        %s221 = smul.addr %s220, 64
        %s222 = scalar_lea.vmem [#allocation5], %s221
        // Predicated region
        $region37: #{tpu_custom_call.1} parent=31 // pred_check
          %p223 = pneg %p82
        $region38: #{tpu_custom_call.1} parent=31 // pred_check_branch
          %225 = sbr.rel (%p223) target = $region40
        $region39: #{tpu_custom_call.1} parent=31 // pred_region
          %226 = dma.done %s219, 1024
        $region40: #{tpu_custom_call.1} parent=31 // pred_fallthru
          _
        %s227 = sand.u32 %s43, 1
        %s228 = scalar_lea.sflag [#allocation3], %s227
        %s229 = sand.u32 %s43, 1
        %s230 = smul.addr %s229, 8
        %s231 = scalar_lea.vmem [#allocation2], %s230
        %p232 = pneg %p56
        %p233 = pneg %p53
        %s234 = sand.u32 %s69, 1
        %s235 = scalar_lea.sflag [#allocation6], %s234
        %s236 = sand.u32 %s69, 1
        %s237 = smul.addr %s236, 64
        %s238 = scalar_lea.vmem [#allocation5], %s237
        %p239 = pneg %p82
        %p240 = pneg %p79
        %p241 = scmp.lt.s32.totalorder %s28, 1
        %s242 = scalar_select %p241, %s28, 1
        %s243 = scalar_lea.vmem %s2, %s242
        %p244 = pneg %p108
        %p245 = pneg %p105
        %p246 = pneg %p136
        %p247 = pneg %p133
        %s248 = sand.u32 %s123, 1
        %s249 = scalar_lea.sflag [#allocation4], %s248
        %s250 = sand.u32 %s123, 1
        %s251 = smul.addr %s250, 8
        %s252 = scalar_lea.vmem [#allocation7], %s251
        %s253 = smul.u32 2, %s27
        %p254 = scmp.lt.s32.totalorder %s28, 1
        %s255 = scalar_select %p254, %s28, 1
        %s256 = scalar_lea.vmem %s2, %s255
        %s257 = smul.u32 2, %s27
        %v259 = vld [vmem:[%s213] sm:$0xf]
        %v260 = vld [vmem:[%s213 + $0x4] sm:$0xf]
        %v261 = vld [vmem:[%s222] sm:$0xf]
        %v262 = vld [vmem:[%s222 + $0x4] sm:$0xf]
        %v263 = vld [vmem:[%s222 + $0x8] sm:$0xf]
        %v264 = vld [vmem:[%s222 + $0xc] sm:$0xf]
        %v265 = vld [vmem:[%s222 + $0x10] sm:$0xf]
        %v266 = vld [vmem:[%s222 + $0x14] sm:$0xf]
        %v267 = vld [vmem:[%s222 + $0x18] sm:$0xf]
        %v268 = vld [vmem:[%s222 + $0x1c] sm:$0xf]
        %v269 = vld [vmem:[%s222 + $0x20] sm:$0xf]
        %v270 = vld [vmem:[%s222 + $0x24] sm:$0xf]
        %v271 = vld [vmem:[%s222 + $0x28] sm:$0xf]
        %v272 = vld [vmem:[%s222 + $0x2c] sm:$0xf]
        %v273 = vld [vmem:[%s222 + $0x30] sm:$0xf]
        %v274 = vld [vmem:[%s222 + $0x34] sm:$0xf]
        %v275 = vld [vmem:[%s222 + $0x38] sm:$0xf]
        %v276 = vld [vmem:[%s222 + $0x3c] sm:$0xf]
        %v277 = vld [vmem:[%s256] sm:$0x1]
        %v279 = vlaneseq
        %v280 = vshrl.u32 %v279, 7
        %v281 = vsub.s32 0, %v280
        %v282 = vrot.slane %v277, %v281
        %v286 = vunpack.c.l.b16 %v259
        %v287 = vunpack.c.l.b16 %v260
        %v288 = vpack.c.b16 %v287, %v286
        %v306 = vunpack.c.l.b16 %v261
        %v307 = vunpack.c.l.b16 %v262
        %v308 = vunpack.c.l.b16 %v263
        %v309 = vunpack.c.l.b16 %v264
        %v310 = vunpack.c.l.b16 %v265
        %v311 = vunpack.c.l.b16 %v266
        %v312 = vunpack.c.l.b16 %v267
        %v313 = vunpack.c.l.b16 %v268
        %v314 = vunpack.c.l.b16 %v269
        %v315 = vunpack.c.l.b16 %v270
        %v316 = vunpack.c.l.b16 %v271
        %v317 = vunpack.c.l.b16 %v272
        %v318 = vunpack.c.l.b16 %v273
        %v319 = vunpack.c.l.b16 %v274
        %v320 = vunpack.c.l.b16 %v275
        %v321 = vunpack.c.l.b16 %v276
        %v322 = vpack.c.b16 %v307, %v306
        %v323 = vpack.c.b16 %v309, %v308
        %v324 = vpack.c.b16 %v311, %v310
        %v325 = vpack.c.b16 %v313, %v312
        %v326 = vpack.c.b16 %v315, %v314
        %v327 = vpack.c.b16 %v317, %v316
        %v328 = vpack.c.b16 %v319, %v318
        %v329 = vpack.c.b16 %v321, %v320
        %338 = vmatprep.subr.bf16.mxu0 0
        %339 = vmatpush1.bf16.msra.mxu0 %v322
        %340 = vmatprep.subr.bf16.mxu0 0
        %341 = vmatpush1.bf16.msra.mxu0 %v323
        %342 = vmatprep.subr.bf16.mxu0 0
        %343 = vmatpush1.bf16.msra.mxu0 %v324
        %344 = vmatprep.subr.bf16.mxu0 0
        %345 = vmatpush1.bf16.msra.mxu0 %v325
        %346 = vmatprep.subr.bf16.mxu0 0
        %347 = vmatpush1.bf16.msra.mxu0 %v326
        %348 = vmatprep.subr.bf16.mxu0 0
        %349 = vmatpush1.bf16.msra.mxu0 %v327
        %350 = vmatprep.subr.bf16.mxu0 0
        %351 = vmatpush1.bf16.msra.mxu0 %v328
        %352 = vmatprep.subr.bf16.mxu0 0
        %353 = vmatpush1.bf16.msra.mxu0 %v329
        %354 = vmatprep.subr.bf16.mxu0 0
        %355 = vmatpush1.bf16.msra.mxu0 0
        %356 = vmatprep.subr.bf16.mxu0 0
        %357 = vmatpush1.bf16.msra.mxu0 0
        %358 = vmatprep.subr.bf16.mxu0 0
        %359 = vmatpush1.bf16.msra.mxu0 0
        %360 = vmatprep.subr.bf16.mxu0 0
        %361 = vmatpush1.bf16.msra.mxu0 0
        %362 = vmatprep.subr.bf16.mxu0 0
        %363 = vmatpush1.bf16.msra.mxu0 0
        %364 = vmatprep.subr.bf16.mxu0 0
        %365 = vmatpush1.bf16.msra.mxu0 0
        %366 = vmatprep.subr.bf16.mxu0 0
        %367 = vmatpush1.bf16.msra.mxu0 0
        %368 = vmatprep.subr.bf16.mxu0 0
        %369 = vmatpush1.bf16.msra.mxu0 0
        %370 = vmatprep.mubr.bf16.mxu0 0
        %371 = vmatmul.mubr.bf16.gmra.mrb[0].mxu0 %v288
        %v372 = vpop.f32.mrb[0].mxu0
        %v373 = vadd.f32 %v282, %v372
        %v374 = vpop.f32.mrb[0].mxu0
        %v375 = vpop.f32.mrb[0].mxu0
        %v376 = vadd.f32 %v282, %v375
        %v377 = vpop.f32.mrb[0].mxu0
        %378 = vdwg.mxu0
        %v379 = vmax.f32 %v373, 0.0
        %v380 = vmax.f32 %v376, 0.0
        %v381 = vpack.c.bf16 %v380, %v379
        %v383 = vunpack.c.l.b16 %v381
        %v384 = vunpack.c.h.b16 %v381
        %v385 = vpack.c.b16 %v383, %v383
        %v386 = vpack.c.b16 %v384, %v384
        %389 = vst [vmem:[%s252] sm:$0xf] %v385
        %390 = vst [vmem:[%s252 + $0x4] sm:$0xf] %v386
        %s391 = sand.u32 %s123, 1
        %s392 = scalar_lea.sflag [#allocation4], %s391
        %s393 = sand.u32 %s123, 1
        %s394 = smul.addr %s393, 8
        %s395 = scalar_lea.vmem [#allocation7], %s394
        // Predicated region
        $region41: #{tpu_custom_call.1} parent=31 // pred_check
          %p396 = pneg %p133
        $region42: #{tpu_custom_call.1} parent=31 // pred_check_branch
          %398 = sbr.rel (%p396) target = $region44
        $region43: #{tpu_custom_call.1} parent=31 // pred_region
          %s399 = smul.u32 2, %s27
          %s401 = ssub.s32 128, 128
          %402 = vsyncadd %s392, %s401
          %s403 = smul.addr %s399, 2
          %s404 = sadd.s32 %s28, %s403
          %s405 = smul.addr %s404, 64
          %s406 = scalar_lea.hbm %s3, %s405
          %s407 = sshll.u32 %s395, 4
          %s408 = int_to_ptr.vmem [resolvable:$true] %s407
          %413 = dma.vmem_to_hbm [thread:$0]  %s408, 128, %s406, %s392, 64, 128, 4
        $region44: #{tpu_custom_call.1} parent=31 // pred_fallthru
          _
      $region32: #{tpu_custom_call.1} parent=5 // pred_fallthru
        _
      %p414 = scmp.le.s32.totalorder 2, %s18
      // Predicated region
      $region45: #{tpu_custom_call.1} parent=5 // pred_check
        %p415 = pneg %p414
      $region46: #{tpu_custom_call.1} parent=5 // pred_check_branch
        %417 = sbr.rel (%p415) target = $region48
      $region47: #{tpu_custom_call.1} parent=5 // pred_region
        %s418 = ssub.s32 %s18, 2
        // Predicated region
        $region49: #{tpu_custom_call.1} parent=47 // pred_check
          %p419 = pneg %p139
        $region50: #{tpu_custom_call.1} parent=47 // pred_check_branch
          %421 = sbr.rel (%p419) target = $region52
        $region51: #{tpu_custom_call.1} parent=47 // pred_region
          %s422 = sand.u32 %s124, 1
          %s423 = scalar_lea.sflag [#allocation4], %s422
          %s424 = sand.u32 %s124, 1
          %s425 = smul.addr %s424, 8
          %s426 = scalar_lea.vmem [#allocation7], %s425
          %427 = dma.done %s423, 128
        $region52: #{tpu_custom_call.1} parent=47 // pred_fallthru
          _
      $region48: #{tpu_custom_call.1} parent=5 // pred_fallthru
        _
    $region6: #{tpu_custom_call.1} parent=1 // loop_footer
      %s22 = sadd.s32 1, %s18
    $region7: #{tpu_custom_call.1} parent=1 // loop_footer_branch
      %17 = sbr.rel target = $region3
    $region8: #{tpu_custom_call.1} parent=1 // loop_exit
      _
    %428 = vsyncpa [#allocation3], 1
    %s429 = scalar_lea.sflag [#allocation3], 1
    %430 = vsyncpa %s429, 1
    %431 = vsyncpa [#allocation6], 1
    %s432 = scalar_lea.sflag [#allocation6], 1
    %433 = vsyncpa %s432, 1
    %434 = vsyncpa [#allocation4], 1
    %s435 = scalar_lea.sflag [#allocation4], 1
    %436 = vsyncpa %s435, 1

</llo_original>
